<compile_context>
chip_gen: v5e
topology: v5e:2x2
jax: 0.10.0
libtpu: 0.0.40
codegen_flags: <defaults>
</compile_context>

<pallas_src>
import jax
import jax.numpy as jnp
from jax.experimental import pallas as pl
from jax.experimental.pallas import tpu as pltpu

_LANE = 128
_BLOCK_BYTES = 4 * 1024 * 1024          # per in/out buffer (double-buffered)
_VMEM_LIMIT_BYTES = 32 * 1024 * 1024    # raise v5e's 16 MiB scoped default


def _round_up(a, b):
    return ((a + b - 1) // b) * b


def _sublane_multiple(dtype):
    # f32 -> 8, bf16/f16 -> 16, int8/fp8 -> 32.
    return max(8, 32 // max(1, dtype.itemsize))


def _compute_dtype(dtype):
    """bf16 stays native on generations with a bf16 VALU (v6e/v7x);
    everything else (and older chips) computes in f32."""
    if dtype == jnp.float32:
        return jnp.float32
    if dtype == jnp.bfloat16:
        kind = jax.devices()[0].device_kind.lower()
        if any(v in kind for v in ("v2", "v3", "v4", "v5")):
            return jnp.float32
        return jnp.bfloat16
    return jnp.float32


def _make_kernel(compute_dtype):
    def kernel(x_ref, o_ref):
        x = x_ref[...].astype(compute_dtype)
        y = 0.5 * x * jnp.clip(x + 2.0, 0.0, 2.0)
        o_ref[...] = y.astype(o_ref.dtype)
    return kernel


def _hard_mish_2d(x2d, compute_dtype):
    rows, cols = x2d.shape
    dtype = x2d.dtype
    sub = _sublane_multiple(dtype)

    bytes_per_row = max(1, cols * dtype.itemsize)
    budget_rows = max(sub, (_BLOCK_BYTES // bytes_per_row) // sub * sub)

    if rows <= sub:
        block_rows = rows               # single full-extent block (tiny input)
    else:
        # At least 2 grid steps so the "parallel" axis shards across both
        # v7x TensorCores; capped at ~4 MiB/buffer for step-overhead amortizing.
        half = _round_up(pl.cdiv(rows, 2), sub)
        block_rows = min(budget_rows, half)

    grid = (pl.cdiv(rows, block_rows),)

    return pl.pallas_call(
        _make_kernel(compute_dtype),
        out_shape=jax.ShapeDtypeStruct((rows, cols), dtype),
        grid_spec=pltpu.PrefetchScalarGridSpec(
            num_scalar_prefetch=0,
            grid=grid,
            in_specs=[pl.BlockSpec((block_rows, cols), lambda i: (i, 0))],
            out_specs=pl.BlockSpec((block_rows, cols), lambda i: (i, 0)),
        ),
        compiler_params=pltpu.CompilerParams(
            dimension_semantics=("parallel",),
            vmem_limit_bytes=_VMEM_LIMIT_BYTES,
        ),
    )(x2d)


@jax.jit
def hard_mish_pallas(x):
    orig_shape = x.shape
    total = x.size
    if total == 0:
        return x
    compute_dtype = _compute_dtype(x.dtype)

    if total % _LANE == 0:
        # Lane-dense path: contiguous reshape (no copy), unmasked 128-wide stores.
        x2d = x.reshape(total // _LANE, _LANE)
        return _hard_mish_2d(x2d, compute_dtype).reshape(orig_shape)

    # Ragged path: no pad / slice HBM passes.  Keep the trailing dim in lanes
    # and let Pallas mask partial blocks/stores.
    cols = orig_shape[-1] if x.ndim >= 1 else 1
    if cols * x.dtype.itemsize <= _BLOCK_BYTES:
        x2d = x.reshape(total // cols, cols)
        return _hard_mish_2d(x2d, compute_dtype).reshape(orig_shape)

    # Rare fallback: non-128-multiple total AND a single trailing row bigger
    # than the block budget -> pad to a lane multiple.
    pad_total = _round_up(total, _LANE)
    flat = jnp.pad(x.reshape(-1), (0, pad_total - total))
    out = _hard_mish_2d(flat.reshape(pad_total // _LANE, _LANE), compute_dtype)
    return out.reshape(-1)[:total].reshape(orig_shape)


def hard_mish_reference(x):
    """Pure-JAX reference: 0.5 * x * clamp(x + 2, 0, 2)."""
    return 0.5 * x * jnp.clip(x + 2.0, 0.0, 2.0)


if __name__ == "__main__":
    key = jax.random.PRNGKey(0)
    k1, k2, k3, k4 = jax.random.split(key, 4)

    # (N, C, H, W) as implied by the module's typical use.
    x = jax.random.normal(k1, (2, 4, 16, 16), dtype=jnp.float32) * 3.0
    out = jax.block_until_ready(hard_mish_pallas(x))
    ref = hard_mish_reference(x)
    assert out.shape == x.shape and out.dtype == x.dtype
    assert jnp.allclose(out, ref, atol=1e-6, rtol=1e-6), "mismatch (aligned)"

    # Ragged path (size not a multiple of 128) — no pad/slice passes.
    x2 = jax.random.normal(k2, (3, 5, 7), dtype=jnp.float32) * 3.0
    out2 = jax.block_until_ready(hard_mish_pallas(x2))
    assert out2.shape == x2.shape
    assert jnp.allclose(out2, hard_mish_reference(x2), atol=1e-6, rtol=1e-6), \
        "mismatch (ragged)"

    # Aligned size whose row count does not divide the block (partial block).
    x3 = jax.random.normal(k3, (5, 3, 128), dtype=jnp.float32) * 3.0
    out3 = jax.block_until_ready(hard_mish_pallas(x3))
    assert jnp.allclose(out3, hard_mish_reference(x3), atol=1e-6, rtol=1e-6), \
        "mismatch (partial block)"

    # bf16 path (native bf16 compute on v6e/v7x, f32 upcast on older gens).
    x4 = (jax.random.normal(k4, (8, 32, 32, 32), dtype=jnp.float32) * 3.0
          ).astype(jnp.bfloat16)
    out4 = jax.block_until_ready(hard_mish_pallas(x4))
    ref4 = hard_mish_reference(x4.astype(jnp.float32))
    assert out4.dtype == jnp.bfloat16 and out4.shape == x4.shape
    assert jnp.allclose(out4.astype(jnp.float32), ref4, atol=0.05, rtol=0.05), \
        "mismatch (bf16)"

    print("KERNEL_OK")
</pallas_src>

<mosaic_0001>
module attributes {stable_mosaic.version = 11 : i64} {
  func.func @kernel(%arg0: i32, %arg1: memref<8x128xf32, #tpu.memory_space<vmem>>, %arg2: memref<8x128xf32, #tpu.memory_space<vmem>>) attributes {dimension_semantics = [#tpu.dimension_semantics<parallel>], iteration_bounds = array<i64: 2>, scalar_prefetch = 0 : i64, scratch_operands = 0 : i64, tpu.core_type = #tpu.core_type<tc>, window_params = [{transform_indices = @transform_0, window_bounds = array<i64: 8, 128>}, {transform_indices = @transform_1, window_bounds = array<i64: 8, 128>}]} {
    %c0 = arith.constant 0 : index
    %c0_0 = arith.constant 0 : index
    %0 = vector.load %arg1[%c0, %c0_0] : memref<8x128xf32, #tpu.memory_space<vmem>>, vector<8x128xf32>
    %cst = arith.constant 5.000000e-01 : f32
    %1 = vector.broadcast %cst : f32 to vector<8x128xf32>
    %2 = arith.mulf %1, %0 : vector<8x128xf32>
    %cst_1 = arith.constant 2.000000e+00 : f32
    %3 = vector.broadcast %cst_1 : f32 to vector<8x128xf32>
    %4 = arith.addf %0, %3 : vector<8x128xf32>
    %cst_2 = arith.constant 0.000000e+00 : f32
    %cst_3 = arith.constant 2.000000e+00 : f32
    %5 = vector.broadcast %cst_2 : f32 to vector<8x128xf32>
    %6 = arith.maximumf %5, %4 : vector<8x128xf32>
    %7 = vector.broadcast %cst_3 : f32 to vector<8x128xf32>
    %8 = arith.minimumf %7, %6 : vector<8x128xf32>
    %9 = arith.mulf %2, %8 : vector<8x128xf32>
    %c0_4 = arith.constant 0 : index
    %c0_5 = arith.constant 0 : index
    %10 = vector.load %arg2[%c0_4, %c0_5] : memref<8x128xf32, #tpu.memory_space<vmem>>, vector<8x128xf32>
    tpu.vector_store %arg2[%c0_4, %c0_5], %9 {strides = array<i32>} : memref<8x128xf32, #tpu.memory_space<vmem>>, vector<8x128xf32>,
    return
  }
  func.func @transform_0(%arg0: i32) -> (i32, i32) {
    %c0_i32 = arith.constant 0 : i32
    %c0_i32_0 = arith.constant 0 : i32
    return %arg0, %c0_i32 : i32, i32
  }
  func.func @transform_1(%arg0: i32) -> (i32, i32) {
    %c0_i32 = arith.constant 0 : i32
    %c0_i32_0 = arith.constant 0 : i32
    return %arg0, %c0_i32 : i32, i32
  }
}

</mosaic_0001>

<llo_original>
// kernel: hard_mish_pallas.1
$region0: #{hard_mish_pallas.1}
  #allocation0 [shape = 'u32[]', space=smem, size = 0x4, offset = 0x4, fixed_abs, tag = 'smem constant byte address 0x4 - core index']
  #allocation1 [shape = 'u32[72,128]{1,0:T(1,128)}', space=vmem, size = 0x9000, scoped, tag = 'internal scratch']
  %s0 = inlined_call_operand.vmem [shape: f32[16,128], index: 0, kind: input, shape index: {}]
  %s1 = inlined_call_operand.vmem [shape: f32[16,128], index: 1, kind: output, shape index: {}]
  %s2 = sld [smem:[#allocation0]]
  $region37: #{hard_mish_pallas.1} parent=0
    _
  %s4 = ssub.s32 1, %s2
  %s5 = scalar_select 0, %s4, %s2
  loop: start=0, step=1, limit=4
  $region2: #{hard_mish_pallas.1} parent=0 // loop_pre_header
    _
  $region3: #{hard_mish_pallas.1} parent=0 // loop_header
    %s7 = sphi 0, %s11
    %p8 = scmp.ge.s32.totalorder %s7, 4
    %s17 = sphi 0, %s19
    %s20 = sphi 0, %s17
    %s21 = sphi 0, %s20
    %s37 = sphi 0, %s21
    %s43 = sphi 0, %s45
    %s46 = sphi 0, %s43
    %s47 = sphi 0, %s46
    %s63 = sphi 0, %s47
  $region4: #{hard_mish_pallas.1} parent=0 // loop_header_branch
    %10 = sbr.rel (%p8) target = $region8
  $region5: #{hard_mish_pallas.1} parent=0 // loop_body
    %s12 = ssub.s32 %s7, 1
    %s13 = ssub.s32 %s7, 2
    %s14 = sadd.s32 %s7, 1
    %s15 = ssub.s32 %s7, %s14
    %p16 = scmp.eq.s32.totalorder %s15, 0
    %s18 = sadd.s32 %s17, 1
    %s19 = scalar_select %p16, %s17, %s18
    %p22 = pneg %p16
    %p23 = scmp.eq.s32.totalorder %s7, 1
    %p24 = por %p22, %p23
    %p25 = scmp.ne.s32.totalorder %s17, %s20
    %p26 = scmp.eq.s32.totalorder %s7, 0
    %p27 = por %p25, %p26
    %p28 = scmp.ne.s32.totalorder %s17, %s20
    %p29 = scmp.eq.s32.totalorder %s12, 1
    %p30 = por %p28, %p29
    %p31 = scmp.ne.s32.totalorder %s20, %s21
    %p32 = scmp.eq.s32.totalorder %s12, 0
    %p33 = por %p31, %p32
    %p34 = scmp.ne.s32.totalorder %s20, %s21
    %p35 = scmp.eq.s32.totalorder %s13, 1
    %p36 = por %p34, %p35
    %p38 = scmp.ne.s32.totalorder %s21, %s37
    %p39 = scmp.eq.s32.totalorder %s13, 0
    %p40 = por %p38, %p39
    %s41 = ssub.s32 %s7, %s14
    %p42 = scmp.eq.s32.totalorder %s41, 0
    %s44 = sadd.s32 %s43, 1
    %s45 = scalar_select %p42, %s43, %s44
    %p48 = pneg %p42
    %p49 = scmp.eq.s32.totalorder %s7, 1
    %p50 = por %p48, %p49
    %p51 = scmp.ne.s32.totalorder %s43, %s46
    %p52 = scmp.eq.s32.totalorder %s7, 0
    %p53 = por %p51, %p52
    %p54 = scmp.ne.s32.totalorder %s43, %s46
    %p55 = scmp.eq.s32.totalorder %s12, 1
    %p56 = por %p54, %p55
    %p57 = scmp.ne.s32.totalorder %s46, %s47
    %p58 = scmp.eq.s32.totalorder %s12, 0
    %p59 = por %p57, %p58
    %p60 = scmp.ne.s32.totalorder %s46, %s47
    %p61 = scmp.eq.s32.totalorder %s13, 1
    %p62 = por %p60, %p61
    %p64 = scmp.ne.s32.totalorder %s47, %s63
    %p65 = scmp.eq.s32.totalorder %s13, 0
    %p66 = por %p64, %p65
    %p67 = scmp.le.s32.totalorder 1, %s7
    %p68 = scmp.lt.s32.totalorder %s7, 3
    %p69 = pnand %p67, %p68
    %p70 = pneg %p69
    // Predicated region
    $region9: #{hard_mish_pallas.1} parent=5 // pred_check
      _
    $region10: #{hard_mish_pallas.1} parent=5 // pred_check_branch
      %72 = sbr.rel (%p69) target = $region12
    $region11: #{hard_mish_pallas.1} parent=5 // pred_region
      %s73 = ssub.s32 %s7, 1
    $region12: #{hard_mish_pallas.1} parent=5 // pred_fallthru
      _
    %p74 = scmp.lt.s32.totalorder %s7, 2
    // Predicated region
    $region13: #{hard_mish_pallas.1} parent=5 // pred_check
      %p75 = pneg %p74
    $region14: #{hard_mish_pallas.1} parent=5 // pred_check_branch
      %77 = sbr.rel (%p75) target = $region16
    $region15: #{hard_mish_pallas.1} parent=5 // pred_region
      // Predicated region
      $region17: #{hard_mish_pallas.1} parent=15 // pred_check
        %p78 = pneg %p27
      $region18: #{hard_mish_pallas.1} parent=15 // pred_check_branch
        %80 = sbr.rel (%p78) target = $region20
      $region19: #{hard_mish_pallas.1} parent=15 // pred_region
        %p81 = scmp.lt.s32.totalorder %s7, 1
        %s82 = scalar_select %p81, %s7, 1
        %s83 = smul.addr %s82, 8
        %s84 = scalar_lea.vmem %s0, %s83
      $region20: #{hard_mish_pallas.1} parent=15 // pred_fallthru
        _
    $region16: #{hard_mish_pallas.1} parent=5 // pred_fallthru
      _
    %p85 = scmp.le.s32.totalorder 1, %s7
    %p86 = scmp.lt.s32.totalorder %s7, 3
    %p87 = pnand %p85, %p86
    %p88 = pneg %p87
    // Predicated region
    $region21: #{hard_mish_pallas.1} parent=5 // pred_check
      _
    $region22: #{hard_mish_pallas.1} parent=5 // pred_check_branch
      %90 = sbr.rel (%p87) target = $region24
    $region23: #{hard_mish_pallas.1} parent=5 // pred_region
      %s91 = ssub.s32 %s7, 1
      %p92 = scmp.lt.s32.totalorder %s12, 1
      %s93 = scalar_select %p92, %s12, 1
      %s94 = smul.addr %s93, 8
      %s95 = scalar_lea.vmem %s0, %s94
      %p96 = pneg %p33
      %p97 = pneg %p30
      %p98 = pneg %p59
      %p99 = pneg %p56
      %p100 = scmp.lt.s32.totalorder %s12, 1
      %s101 = scalar_select %p100, %s12, 1
      %s102 = smul.addr %s101, 8
      %s103 = scalar_lea.vmem %s1, %s102
      %p104 = scmp.lt.s32.totalorder %s12, 1
      %s105 = scalar_select %p104, %s12, 1
      %s106 = smul.addr %s105, 8
      %s107 = scalar_lea.vmem %s0, %s106
      %p108 = scmp.lt.s32.totalorder %s12, 1
      %s109 = scalar_select %p108, %s12, 1
      %s110 = smul.addr %s109, 8
      %s111 = scalar_lea.vmem %s1, %s110
      %v112 = vld [vmem:[%s107] sm:$0xff]
      %v113 = vmul.f32 %v112, 0.5
      %v114 = vadd.f32 %v112, 2.0
      %v115 = vmax.f32 %v114, 0.0
      %v116 = vmin.f32 %v115, 2.0
      %v117 = vmul.f32 %v113, %v116
      %118 = vst [vmem:[%s111] sm:$0xff] %v117
      %p119 = scmp.lt.s32.totalorder %s12, 1
      %s120 = scalar_select %p119, %s12, 1
      %s121 = smul.addr %s120, 8
      %s122 = scalar_lea.vmem %s1, %s121
      // Predicated region
      $region25: #{hard_mish_pallas.1} parent=23 // pred_check
        %p123 = pneg %p56
      $region26: #{hard_mish_pallas.1} parent=23 // pred_check_branch
        %125 = sbr.rel (%p123) target = $region28
      $region27: #{hard_mish_pallas.1} parent=23 // pred_region
        _
      $region28: #{hard_mish_pallas.1} parent=23 // pred_fallthru
        _
    $region24: #{hard_mish_pallas.1} parent=5 // pred_fallthru
      _
    %p126 = scmp.le.s32.totalorder 2, %s7
    // Predicated region
    $region29: #{hard_mish_pallas.1} parent=5 // pred_check
      %p127 = pneg %p126
    $region30: #{hard_mish_pallas.1} parent=5 // pred_check_branch
      %129 = sbr.rel (%p127) target = $region32
    $region31: #{hard_mish_pallas.1} parent=5 // pred_region
      %s130 = ssub.s32 %s7, 2
      // Predicated region
      $region33: #{hard_mish_pallas.1} parent=31 // pred_check
        %p131 = pneg %p62
      $region34: #{hard_mish_pallas.1} parent=31 // pred_check_branch
        %133 = sbr.rel (%p131) target = $region36
      $region35: #{hard_mish_pallas.1} parent=31 // pred_region
        %p134 = scmp.lt.s32.totalorder %s13, 1
        %s135 = scalar_select %p134, %s13, 1
        %s136 = smul.addr %s135, 8
        %s137 = scalar_lea.vmem %s1, %s136
      $region36: #{hard_mish_pallas.1} parent=31 // pred_fallthru
        _
    $region32: #{hard_mish_pallas.1} parent=5 // pred_fallthru
      _
  $region6: #{hard_mish_pallas.1} parent=0 // loop_footer
    %s11 = sadd.s32 1, %s7
  $region7: #{hard_mish_pallas.1} parent=0 // loop_footer_branch
    %6 = sbr.rel target = $region3
  $region8: #{hard_mish_pallas.1} parent=0 // loop_exit
    _

</llo_original>
